<compile_context>
chip_gen: v7x
topology: tpu7x:2x2x1
jax: 0.10.0
libtpu: 0.0.40
codegen_flags: <defaults>
</compile_context>

<pallas_src>
import jax
import jax.numpy as jnp
from jax.experimental import pallas as pl
from jax.experimental.pallas import tpu as pltpu

_LANES = 128
_TARGET_TILE_BYTES = 4 << 20     # ~4 MiB/tile: amortizes per-step overhead
_SMALL_BYPASS_BYTES = 4 << 20    # below this, Pallas launch cost > DMA cost


def _copy_kernel(x_ref, o_ref):
    # Pure pass-through of the current VMEM tile.
    o_ref[...] = x_ref[...]


def _sublane(itemsize):
    # dtype-aware sublane packing: 8 rows (32-bit), 16 (16-bit), 32 (8-bit).
    return {1: 32, 2: 16}.get(itemsize, 8)


def _vmem_limit(tile_bytes):
    # in + out, each double-buffered, plus slack.  Never below the 32 MiB
    # v6e/v7x scoped default (also raises v5e's 16 MiB default), capped well
    # under v7x's 64 MiB physical VMEM.
    need = 4 * tile_bytes + (4 << 20)
    return int(min(48 << 20, max(32 << 20, need)))


def _copy_2d(x2):
    """Lane-dense copy: feat is a multiple of 128 -> full-width vector stores."""
    rows, feat = x2.shape
    itemsize = x2.dtype.itemsize
    sub = _sublane(itemsize)

    max_rows = max(sub, _TARGET_TILE_BYTES // max(1, feat * itemsize))
    max_rows = max(sub, (max_rows // sub) * sub)
    tile_rows = rows if rows <= max_rows else max_rows
    tile_bytes = tile_rows * feat * itemsize

    return pl.pallas_call(
        _copy_kernel,
        out_shape=jax.ShapeDtypeStruct((rows, feat), x2.dtype),
        grid=(pl.cdiv(rows, tile_rows),),
        in_specs=[pl.BlockSpec((tile_rows, feat), lambda i: (i, 0))],
        out_specs=pl.BlockSpec((tile_rows, feat), lambda i: (i, 0)),
        compiler_params=pltpu.CompilerParams(
            dimension_semantics=("parallel",),
            vmem_limit_bytes=_vmem_limit(tile_bytes),
        ),
        cost_estimate=pl.CostEstimate(
            flops=0, transcendentals=0,
            bytes_accessed=2 * rows * feat * itemsize),
    )(x2)


def _copy_1d(x1):
    """Ragged fallback: flat 1D copy in 128*sublane-multiple blocks, so only
    the final (boundary) block uses masked stores."""
    total = x1.shape[0]
    itemsize = x1.dtype.itemsize
    chunk = _sublane(itemsize) * _LANES
    tile = max(chunk, (_TARGET_TILE_BYTES // (chunk * itemsize)) * chunk)
    if tile >= total:
        tile = total                 # full-extent block (always legal)
    tile_bytes = tile * itemsize

    return pl.pallas_call(
        _copy_kernel,
        out_shape=jax.ShapeDtypeStruct((total,), x1.dtype),
        grid=(pl.cdiv(total, tile),),
        in_specs=[pl.BlockSpec((tile,), lambda i: (i,))],
        out_specs=pl.BlockSpec((tile,), lambda i: (i,)),
        compiler_params=pltpu.CompilerParams(
            dimension_semantics=("parallel",),
            vmem_limit_bytes=_vmem_limit(tile_bytes),
        ),
        cost_estimate=pl.CostEstimate(
            flops=0, transcendentals=0, bytes_accessed=2 * total * itemsize),
    )(x1)


def materialize_copy(x, *, small_bypass_bytes=_SMALL_BYPASS_BYTES):
    """Identity materialization of `x` through a Pallas TPU copy kernel."""
    total = x.size
    itemsize = x.dtype.itemsize
    if total == 0 or total * itemsize <= small_bypass_bytes:
        # KB-scale SchNet representations: skip Pallas entirely.
        return x

    orig_shape = x.shape
    feat = orig_shape[-1] if x.ndim >= 2 else 0
    if x.ndim >= 2 and feat % _LANES == 0:
        # Collapsing leading dims is a free, layout-preserving view.
        out = _copy_2d(x.reshape(total // feat, feat))
    else:
        # TODO(synk): the 1D flatten of an exotic-layout array may itself cost
        #             an XLA relayout; acceptable for this identity fallback.
        out = _copy_1d(x.reshape(total))
    return out.reshape(orig_shape)


class OutputModule:
    """Pallas port of the SchNetPack OutputModule base class.

    Args:
        requires_dr (bool, optional): if True, concrete subclasses would also
            return the derivative of the output.  Unused by the base class.
        materialize (bool, optional): if True, route the representation tensor
            through the Pallas copy kernel.  Default False: the zero-HBM-traffic
            pass-through (JAX arrays are immutable).
        small_bypass_bytes (int, optional): arrays at or below this size skip
            pallas_call even when materialize=True.
    """

    def __init__(self, requires_dr=False, materialize=False,
                 small_bypass_bytes=_SMALL_BYPASS_BYTES):
        self.requires_dr = requires_dr
        self.materialize = materialize
        self.small_bypass_bytes = small_bypass_bytes

    def forward(self, inputs):
        x = inputs["representation"]
        if not self.materialize:
            return x                  # zero-cost identity (immutable)
        return materialize_copy(x, small_bypass_bytes=self.small_bypass_bytes)

    __call__ = forward


if __name__ == "__main__":
    key = jax.random.PRNGKey(0)
    k1, k2, k3 = jax.random.split(key, 3)

    # Default: zero-cost pass-through (the recommended path for an identity).
    rep = jax.random.normal(k1, (8, 32), dtype=jnp.float32)
    module = OutputModule(requires_dr=False)
    out = module({"representation": rep})
    assert out is rep

    # Materializing module: KB-scale bypass still avoids Pallas, stays correct.
    mat = OutputModule(materialize=True)
    out_b = jax.block_until_ready(mat({"representation": rep}))
    assert out_b.shape == rep.shape and out_b.dtype == rep.dtype
    assert bool(jnp.allclose(out_b, rep))

    # Force the Pallas copy kernel (bypass disabled) on small shapes.
    forced = OutputModule(materialize=True, small_bypass_bytes=0)

    # Lane-dense 2D path: native last dim is a multiple of 128.
    rep_ld = jax.random.normal(k2, (64, 128), dtype=jnp.float32)
    out_ld = jax.block_until_ready(forced({"representation": rep_ld}))
    assert out_ld.shape == rep_ld.shape and out_ld.dtype == rep_ld.dtype
    assert bool(jnp.allclose(out_ld, rep_ld))

    # Ragged fallback (1D lane-dense blocks): bf16 with a 50-wide last dim.
    rep_rg = jax.random.normal(k3, (10, 50)).astype(jnp.bfloat16)
    out_rg = jax.block_until_ready(forced({"representation": rep_rg}))
    assert out_rg.shape == rep_rg.shape and out_rg.dtype == rep_rg.dtype
    assert bool(jnp.array_equal(out_rg, rep_rg))

    print("KERNEL_OK")
</pallas_src>

<mosaic_0001>
module attributes {stable_mosaic.version = 11 : i64} {
  func.func @_copy_kernel(%arg0: i32, %arg1: memref<64x128xf32, #tpu.memory_space<vmem>>, %arg2: memref<64x128xf32, #tpu.memory_space<vmem>>) attributes {dimension_semantics = [#tpu.dimension_semantics<parallel>], iteration_bounds = array<i64: 1>, scalar_prefetch = 0 : i64, scratch_operands = 0 : i64, tpu.core_type = #tpu.core_type<tc>, window_params = [{transform_indices = @transform_0, window_bounds = array<i64: 64, 128>}, {transform_indices = @transform_1, window_bounds = array<i64: 64, 128>}]} {
    %c0 = arith.constant 0 : index
    %c0_0 = arith.constant 0 : index
    %0 = vector.load %arg1[%c0, %c0_0] : memref<64x128xf32, #tpu.memory_space<vmem>>, vector<64x128xf32>
    %c0_1 = arith.constant 0 : index
    %c0_2 = arith.constant 0 : index
    %1 = vector.load %arg2[%c0_1, %c0_2] : memref<64x128xf32, #tpu.memory_space<vmem>>, vector<64x128xf32>
    tpu.vector_store %arg2[%c0_1, %c0_2], %0 {strides = array<i32>} : memref<64x128xf32, #tpu.memory_space<vmem>>, vector<64x128xf32>,
    return
  }
  func.func @transform_0(%arg0: i32) -> (i32, i32) {
    %c0_i32 = arith.constant 0 : i32
    %c0_i32_0 = arith.constant 0 : i32
    return %arg0, %c0_i32 : i32, i32
  }
  func.func @transform_1(%arg0: i32) -> (i32, i32) {
    %c0_i32 = arith.constant 0 : i32
    %c0_i32_0 = arith.constant 0 : i32
    return %arg0, %c0_i32 : i32, i32
  }
}

</mosaic_0001>

<llo_original>
// kernel: tpu_custom_call.1
$region0: #{tpu_custom_call.1}
  #allocation0 [shape = 'u32[]', space=smem, size = 0x4, offset = 0x4, fixed_abs, tag = 'smem constant byte address 0x4 - core index']
  #allocation1 [shape = 'u32[144,128]{1,0:T(1,128)}', space=vmem, size = 0x12000, scoped, tag = 'internal scratch']
  %s0 = inlined_call_operand.hbm [shape: f32[64,128], index: 0, kind: input, shape index: {}]
  %s1 = inlined_call_operand.hbm [shape: f32[64,128], index: 1, kind: output, shape index: {}]
  %s2 = sld [smem:[#allocation0]]
  $region18: #{tpu_custom_call.1} parent=0
    _
  %s4 = ssub.s32 1, %s2
  %s5 = scalar_select 0, %s4, %s2
  $region1: #{tpu_custom_call.1} parent=0
    #allocation2 [shape = 'u8[32768]{0}', space=vmem, size = 0x8000, scoped, tag = 'input window, operand 0, single buffered']
    #allocation3 [shape = 's32[1]{0}', space=sflag, size = 0x4, scoped, tag = 'scoped memory for tpu_custom_call.1']
    #allocation4 [shape = 's32[1]{0}', space=sflag, size = 0x4, scoped, tag = 'scoped memory for tpu_custom_call.1']
    #allocation5 [shape = 'u8[32768]{0}', space=vmem, size = 0x8000, scoped, tag = 'output window, operand 0, single buffered']
    %6 = vsyncpa [#allocation3], 0
    %7 = vsyncpa [#allocation4], 0
    // Predicated region
    $region2: #{tpu_custom_call.1} parent=1 // pred_check
      _
    $region3: #{tpu_custom_call.1} parent=1 // pred_check_branch
      %9 = sbr.rel (0) target = $region5
    $region4: #{tpu_custom_call.1} parent=1 // pred_region
      %s11 = ssub.s32 1024, 1024
      %12 = vsyncadd [#allocation3], %s11
      %s13 = sshll.u32 [#allocation2], 4
      %s14 = int_to_ptr.vmem [resolvable:$true] %s13
      %19 = dma.hbm_to_vmem [thread:$0]  %s0, 1024, %s14, [#allocation3], 128, 128, 8
    $region5: #{tpu_custom_call.1} parent=1 // pred_fallthru
      _
    // Predicated region
    $region6: #{tpu_custom_call.1} parent=1 // pred_check
      _
    $region7: #{tpu_custom_call.1} parent=1 // pred_check_branch
      %21 = sbr.rel (0) target = $region9
    $region8: #{tpu_custom_call.1} parent=1 // pred_region
      %22 = dma.done [#allocation3], 1024
    $region9: #{tpu_custom_call.1} parent=1 // pred_fallthru
      _
    %v23 = vld [vmem:[#allocation2] sm:$0xff]
    %v24 = vld [vmem:[#allocation2 + $0x8] sm:$0xff]
    %v25 = vld [vmem:[#allocation2 + $0x10] sm:$0xff]
    %v26 = vld [vmem:[#allocation2 + $0x18] sm:$0xff]
    %v27 = vld [vmem:[#allocation2 + $0x20] sm:$0xff]
    %v28 = vld [vmem:[#allocation2 + $0x28] sm:$0xff]
    %v29 = vld [vmem:[#allocation2 + $0x30] sm:$0xff]
    %v30 = vld [vmem:[#allocation2 + $0x38] sm:$0xff]
    %31 = vst [vmem:[#allocation5] sm:$0xff] %v23
    %32 = vst [vmem:[#allocation5 + $0x8] sm:$0xff] %v24
    %33 = vst [vmem:[#allocation5 + $0x10] sm:$0xff] %v25
    %34 = vst [vmem:[#allocation5 + $0x18] sm:$0xff] %v26
    %35 = vst [vmem:[#allocation5 + $0x20] sm:$0xff] %v27
    %36 = vst [vmem:[#allocation5 + $0x28] sm:$0xff] %v28
    %37 = vst [vmem:[#allocation5 + $0x30] sm:$0xff] %v29
    %38 = vst [vmem:[#allocation5 + $0x38] sm:$0xff] %v30
    // Predicated region
    $region10: #{tpu_custom_call.1} parent=1 // pred_check
      _
    $region11: #{tpu_custom_call.1} parent=1 // pred_check_branch
      %40 = sbr.rel (0) target = $region13
    $region12: #{tpu_custom_call.1} parent=1 // pred_region
      %s42 = ssub.s32 1024, 1024
      %43 = vsyncadd [#allocation4], %s42
      %s44 = sshll.u32 [#allocation5], 4
      %s45 = int_to_ptr.vmem [resolvable:$true] %s44
      %50 = dma.vmem_to_hbm [thread:$0]  %s45, 1024, %s1, [#allocation4], 128, 128, 8
    $region13: #{tpu_custom_call.1} parent=1 // pred_fallthru
      _
    // Predicated region
    $region14: #{tpu_custom_call.1} parent=1 // pred_check
      _
    $region15: #{tpu_custom_call.1} parent=1 // pred_check_branch
      %52 = sbr.rel (0) target = $region17
    $region16: #{tpu_custom_call.1} parent=1 // pred_region
      %53 = dma.done [#allocation4], 1024
    $region17: #{tpu_custom_call.1} parent=1 // pred_fallthru
      _
    %54 = vsyncpa [#allocation3], 1
    %55 = vsyncpa [#allocation4], 1

</llo_original>
